<compile_context>
chip_gen: v5e
topology: v5e:2x2
jax: 0.10.0
libtpu: 0.0.40
codegen_flags: <defaults>
</compile_context>

<pallas_src>
import functools

import jax
import jax.numpy as jnp
from jax.experimental import pallas as pl
from jax.experimental.pallas import tpu as pltpu


def _leaky_relu(x, slope=0.2):
    return jnp.where(x > 0, x, slope * x)


def _latent_disc_kernel(zT_ref, w1_ref, b1_ref, w2_ref, b2_ref, w3_ref, b3_ref,
                        o_ref, *, matmul_dtype):
    zT = zT_ref[...]                                      # (L, TB) f32, batch on lanes

    # Layer 1: Linear(latent -> hidden) == W1 @ z^T, + bias, LeakyReLU(0.2)
    h = jnp.dot(w1_ref[...].astype(matmul_dtype), zT.astype(matmul_dtype),
                preferred_element_type=jnp.float32)       # (H, TB) on the MXU
    h = _leaky_relu(h + b1_ref[...])                      # b1 (H, 1) lane-broadcast

    # Layer 2: Linear(hidden -> hidden), + bias, LeakyReLU(0.2)
    h = jnp.dot(w2_ref[...].astype(matmul_dtype), h.astype(matmul_dtype),
                preferred_element_type=jnp.float32)       # (H, TB)
    h = _leaky_relu(h + b2_ref[...])

    # Layer 3: Linear(hidden -> 1) + Sigmoid.
    # N=1 MXU matmul would waste the array; use VPU multiply + sublane reduce instead.
    logits = jnp.sum(h * w3_ref[...], axis=0, keepdims=True) + b3_ref[...]   # (1, TB)
    o_ref[...] = jax.nn.sigmoid(logits).astype(o_ref.dtype)                  # EUP sigmoid


def _round_up(x, m):
    return ((x + m - 1) // m) * m


def latent_discriminator(z, params, *, block_b=512, matmul_dtype=jnp.float32):
    """Fused LatentDiscriminator forward.

    z:      (B, latent_dim) float32.
    params: PyTorch nn.Linear convention:
            w1 (H, L), b1 (H,), w2 (H, H), b2 (H,), w3 (1, H), b3 (1,).
    Returns (B, 1) float32, matching LatentDiscriminator.forward(z).
    """
    B, L = z.shape
    H = params["w1"].shape[0]
    assert block_b % 128 == 0, "block_b must be a multiple of 128 (lane width)"

    # Batch tile = lane dimension.  Keep it a multiple of 128 (full-lane stores) and
    # cap it so small batches use a single tile.
    tb = min(block_b, _round_up(B, 128))
    Bp = _round_up(B, tb)
    n_tiles = Bp // tb

    # Feature-major layout: z^T is (L, Bp).  Weights stay in PyTorch (out, in) layout.
    zT = jnp.pad(z, ((0, Bp - B), (0, 0))).T              # (L, Bp)
    w1 = params["w1"]                                     # (H, L)
    b1 = params["b1"].reshape(H, 1)
    w2 = params["w2"]                                     # (H, H)
    b2 = params["b2"].reshape(H, 1)
    w3 = params["w3"].reshape(H, 1)                       # (1, H) row -> (H, 1) column
    b3 = params["b3"].reshape(1, 1)

    # Weights/biases: full blocks with constant index_map -> fetched once, VMEM-resident.
    const = lambda shape: pl.BlockSpec(shape, lambda i: (0, 0))

    out = pl.pallas_call(
        functools.partial(_latent_disc_kernel, matmul_dtype=matmul_dtype),
        out_shape=jax.ShapeDtypeStruct((1, Bp), jnp.float32),
        grid=(n_tiles,),
        in_specs=[
            pl.BlockSpec((L, tb), lambda i: (0, i)),      # z^T batch tile (double-buffered)
            const((H, L)), const((H, 1)),
            const((H, H)), const((H, 1)),
            const((H, 1)), const((1, 1)),
        ],
        out_specs=pl.BlockSpec((1, tb), lambda i: (0, i)),  # lane-dense output slab
        compiler_params=pltpu.CompilerParams(
            dimension_semantics=("parallel",),            # batch tiles independent (v7x 2 TCs)
            vmem_limit_bytes=32 * 1024 * 1024,            # explicit, safe on v5e/v6e/v7x
        ),
    )(zT, w1, b1, w2, b2, w3, b3)

    return out[0, :B].reshape(B, 1)


def _reference(z, p):
    h = z @ p["w1"].T + p["b1"]
    h = jnp.where(h > 0, h, 0.2 * h)
    h = h @ p["w2"].T + p["b2"]
    h = jnp.where(h > 0, h, 0.2 * h)
    return jax.nn.sigmoid(h @ p["w3"].T + p["b3"])


if __name__ == "__main__":
    key = jax.random.PRNGKey(0)
    B, L, H = 8, 32, 128  # small shapes: batch=8, latent_dim=32, hidden_dim=128

    k_z, k1, k2, k3, k4, k5, k6, k_z2 = jax.random.split(key, 8)
    z = jax.random.normal(k_z, (B, L), dtype=jnp.float32)

    # Deterministic params (nn.Linear convention: weight (out, in), bias (out,)).
    params = {
        "w1": jax.random.normal(k1, (H, L), dtype=jnp.float32) * 0.1,
        "b1": jax.random.normal(k2, (H,), dtype=jnp.float32) * 0.1,
        "w2": jax.random.normal(k3, (H, H), dtype=jnp.float32) * 0.1,
        "b2": jax.random.normal(k4, (H,), dtype=jnp.float32) * 0.1,
        "w3": jax.random.normal(k5, (1, H), dtype=jnp.float32) * 0.1,
        "b3": jax.random.normal(k6, (1,), dtype=jnp.float32) * 0.1,
    }

    # Small-batch path (single padded tile).
    out = jax.block_until_ready(latent_discriminator(z, params))
    ref = _reference(z, params)
    assert out.shape == (B, 1)
    assert jnp.allclose(out, ref, atol=1e-5, rtol=1e-5), "mismatch vs reference (B=8)"

    # Multi-tile + ragged-batch path (B=300 padded to 384, 3 tiles of 128).
    B2 = 300
    z2 = jax.random.normal(k_z2, (B2, L), dtype=jnp.float32)
    out2 = jax.block_until_ready(latent_discriminator(z2, params, block_b=128))
    ref2 = _reference(z2, params)
    assert out2.shape == (B2, 1)
    assert jnp.allclose(out2, ref2, atol=1e-5, rtol=1e-5), "mismatch vs reference (B=300)"

    print("KERNEL_OK")
</pallas_src>

<mosaic_0001>
module attributes {stable_mosaic.version = 11 : i64} {
  func.func @_latent_disc_kernel(%arg0: i32, %arg1: memref<32x128xf32, #tpu.memory_space<vmem>>, %arg2: memref<128x32xf32, #tpu.memory_space<vmem>>, %arg3: memref<128x1xf32, #tpu.memory_space<vmem>>, %arg4: memref<128x128xf32, #tpu.memory_space<vmem>>, %arg5: memref<128x1xf32, #tpu.memory_space<vmem>>, %arg6: memref<128x1xf32, #tpu.memory_space<vmem>>, %arg7: memref<1x1xf32, #tpu.memory_space<vmem>>, %arg8: memref<1x128xf32, #tpu.memory_space<vmem>>) attributes {dimension_semantics = [#tpu.dimension_semantics<parallel>], iteration_bounds = array<i64: 1>, scalar_prefetch = 0 : i64, scratch_operands = 0 : i64, tpu.core_type = #tpu.core_type<tc>, window_params = [{transform_indices = @transform_0, window_bounds = array<i64: 32, 128>}, {pipeline_mode = #tpu.pipeline_mode<synchronous>, transform_indices = @transform_1, window_bounds = array<i64: 128, 32>}, {pipeline_mode = #tpu.pipeline_mode<synchronous>, transform_indices = @transform_2, window_bounds = array<i64: 128, 1>}, {pipeline_mode = #tpu.pipeline_mode<synchronous>, transform_indices = @transform_3, window_bounds = array<i64: 128, 128>}, {pipeline_mode = #tpu.pipeline_mode<synchronous>, transform_indices = @transform_4, window_bounds = array<i64: 128, 1>}, {pipeline_mode = #tpu.pipeline_mode<synchronous>, transform_indices = @transform_5, window_bounds = array<i64: 128, 1>}, {pipeline_mode = #tpu.pipeline_mode<synchronous>, transform_indices = @transform_6, window_bounds = array<i64: 1, 1>}, {transform_indices = @transform_7, window_bounds = array<i64: 1, 128>}]} {
    %c0 = arith.constant 0 : index
    %c0_0 = arith.constant 0 : index
    %0 = vector.load %arg1[%c0, %c0_0] : memref<32x128xf32, #tpu.memory_space<vmem>>, vector<32x128xf32>
    %c0_1 = arith.constant 0 : index
    %c0_2 = arith.constant 0 : index
    %1 = vector.load %arg2[%c0_1, %c0_2] : memref<128x32xf32, #tpu.memory_space<vmem>>, vector<128x32xf32>
    %cst = arith.constant dense<0.000000e+00> : vector<128x128xf32>
    %2 = tpu.matmul %1, %0, %cst {dimension_numbers = #tpu.dot_dimension_numbers<[1], [0], [0], [1], [0, 0, 1, 1], [], []>} : vector<128x32xf32>, vector<32x128xf32>, vector<128x128xf32> -> vector<128x128xf32>
    %c0_3 = arith.constant 0 : index
    %c0_4 = arith.constant 0 : index
    %3 = vector.load %arg3[%c0_3, %c0_4] : memref<128x1xf32, #tpu.memory_space<vmem>>, vector<128x1xf32>
    %4 = vector.broadcast %3 : vector<128x1xf32> to vector<128x128xf32>
    %5 = arith.addf %2, %4 : vector<128x128xf32>
    %cst_5 = arith.constant 0.000000e+00 : f32
    %6 = vector.broadcast %cst_5 : f32 to vector<128x128xf32>
    %7 = arith.cmpf ogt, %5, %6 : vector<128x128xf32>
    %cst_6 = arith.constant 2.000000e-01 : f32
    %8 = vector.broadcast %cst_6 : f32 to vector<128x128xf32>
    %9 = arith.mulf %8, %5 : vector<128x128xf32>
    %10 = arith.select %7, %5, %9 : vector<128x128xi1>, vector<128x128xf32>
    %c0_7 = arith.constant 0 : index
    %c0_8 = arith.constant 0 : index
    %11 = vector.load %arg4[%c0_7, %c0_8] : memref<128x128xf32, #tpu.memory_space<vmem>>, vector<128x128xf32>
    %cst_9 = arith.constant dense<0.000000e+00> : vector<128x128xf32>
    %12 = tpu.matmul %11, %10, %cst_9 {dimension_numbers = #tpu.dot_dimension_numbers<[1], [0], [0], [1], [0, 0, 1, 1], [], []>} : vector<128x128xf32>, vector<128x128xf32>, vector<128x128xf32> -> vector<128x128xf32>
    %c0_10 = arith.constant 0 : index
    %c0_11 = arith.constant 0 : index
    %13 = vector.load %arg5[%c0_10, %c0_11] : memref<128x1xf32, #tpu.memory_space<vmem>>, vector<128x1xf32>
    %14 = vector.broadcast %13 : vector<128x1xf32> to vector<128x128xf32>
    %15 = arith.addf %12, %14 : vector<128x128xf32>
    %cst_12 = arith.constant 0.000000e+00 : f32
    %16 = vector.broadcast %cst_12 : f32 to vector<128x128xf32>
    %17 = arith.cmpf ogt, %15, %16 : vector<128x128xf32>
    %cst_13 = arith.constant 2.000000e-01 : f32
    %18 = vector.broadcast %cst_13 : f32 to vector<128x128xf32>
    %19 = arith.mulf %18, %15 : vector<128x128xf32>
    %20 = arith.select %17, %15, %19 : vector<128x128xi1>, vector<128x128xf32>
    %c0_14 = arith.constant 0 : index
    %c0_15 = arith.constant 0 : index
    %21 = vector.load %arg6[%c0_14, %c0_15] : memref<128x1xf32, #tpu.memory_space<vmem>>, vector<128x1xf32>
    %22 = vector.broadcast %21 : vector<128x1xf32> to vector<128x128xf32>
    %23 = arith.mulf %20, %22 : vector<128x128xf32>
    %cst_16 = arith.constant dense<0.000000e+00> : vector<128xf32>
    %24 = vector.multi_reduction <add>, %23, %cst_16 [0] : vector<128x128xf32> to vector<128xf32>
    %25 = vector.shape_cast %24 : vector<128xf32> to vector<1x128xf32>
    %c0_17 = arith.constant 0 : index
    %c0_18 = arith.constant 0 : index
    %26 = vector.load %arg7[%c0_17, %c0_18] : memref<1x1xf32, #tpu.memory_space<vmem>>, vector<1x1xf32>
    %27 = vector.broadcast %26 : vector<1x1xf32> to vector<1x128xf32>
    %28 = arith.addf %25, %27 : vector<1x128xf32>
    %29 = arith.negf %28 : vector<1x128xf32>
    %30 = math.exp %29 : vector<1x128xf32>
    %cst_19 = arith.constant 1.000000e+00 : f32
    %31 = vector.broadcast %cst_19 : f32 to vector<1x128xf32>
    %32 = arith.addf %31, %30 : vector<1x128xf32>
    %33 = arith.divf %31, %32 : vector<1x128xf32>
    %c0_20 = arith.constant 0 : index
    %c0_21 = arith.constant 0 : index
    %34 = vector.load %arg8[%c0_20, %c0_21] : memref<1x128xf32, #tpu.memory_space<vmem>>, vector<1x128xf32>
    tpu.vector_store %arg8[%c0_20, %c0_21], %33 {strides = array<i32>} : memref<1x128xf32, #tpu.memory_space<vmem>>, vector<1x128xf32>,
    return
  }
  func.func @transform_0(%arg0: i32) -> (i32, i32) {
    %c0_i32 = arith.constant 0 : i32
    %c0_i32_0 = arith.constant 0 : i32
    return %c0_i32, %arg0 : i32, i32
  }
  func.func @transform_1(%arg0: i32) -> (i32, i32) {
    %c0_i32 = arith.constant 0 : i32
    %c0_i32_0 = arith.constant 0 : i32
    %c0_i32_1 = arith.constant 0 : i32
    return %c0_i32, %c0_i32_0 : i32, i32
  }
  func.func @transform_2(%arg0: i32) -> (i32, i32) {
    %c0_i32 = arith.constant 0 : i32
    %c0_i32_0 = arith.constant 0 : i32
    %c0_i32_1 = arith.constant 0 : i32
    return %c0_i32, %c0_i32_0 : i32, i32
  }
  func.func @transform_3(%arg0: i32) -> (i32, i32) {
    %c0_i32 = arith.constant 0 : i32
    %c0_i32_0 = arith.constant 0 : i32
    %c0_i32_1 = arith.constant 0 : i32
    return %c0_i32, %c0_i32_0 : i32, i32
  }
  func.func @transform_4(%arg0: i32) -> (i32, i32) {
    %c0_i32 = arith.constant 0 : i32
    %c0_i32_0 = arith.constant 0 : i32
    %c0_i32_1 = arith.constant 0 : i32
    return %c0_i32, %c0_i32_0 : i32, i32
  }
  func.func @transform_5(%arg0: i32) -> (i32, i32) {
    %c0_i32 = arith.constant 0 : i32
    %c0_i32_0 = arith.constant 0 : i32
    %c0_i32_1 = arith.constant 0 : i32
    return %c0_i32, %c0_i32_0 : i32, i32
  }
  func.func @transform_6(%arg0: i32) -> (i32, i32) {
    %c0_i32 = arith.constant 0 : i32
    %c0_i32_0 = arith.constant 0 : i32
    %c0_i32_1 = arith.constant 0 : i32
    return %c0_i32, %c0_i32_0 : i32, i32
  }
  func.func @transform_7(%arg0: i32) -> (i32, i32) {
    %c0_i32 = arith.constant 0 : i32
    %c0_i32_0 = arith.constant 0 : i32
    return %c0_i32, %arg0 : i32, i32
  }
}

</mosaic_0001>

<llo_original>
// kernel: tpu_custom_call.1
$region0: #{tpu_custom_call.1}
  #allocation0 [shape = 'u32[]', space=smem, size = 0x4, offset = 0x4, fixed_abs, tag = 'smem constant byte address 0x4 - core index']
  #allocation1 [shape = 'u32[72,128]{1,0:T(1,128)}', space=vmem, size = 0x9000, scoped, tag = 'internal scratch']
  #allocation2 [shape = 'f32[1,1]{1,0:T(1,128)S(1)}', space=vmem, size = 0x200, scoped, tag = 'scoped memory for tpu_custom_call.1']
  %s0 = inlined_call_operand.vmem [shape: f32[32,128], index: 0, kind: input, shape index: {}]
  %s1 = inlined_call_operand.vmem [shape: f32[128,32], index: 1, kind: input, shape index: {}]
  %s2 = inlined_call_operand.vmem [shape: f32[128,1], index: 2, kind: input, shape index: {}]
  %s3 = inlined_call_operand.vmem [shape: f32[128,128], index: 3, kind: input, shape index: {}]
  %s4 = inlined_call_operand.vmem [shape: f32[128,1], index: 4, kind: input, shape index: {}]
  %s5 = inlined_call_operand.vmem [shape: f32[128,1], index: 5, kind: input, shape index: {}]
  %s6 = inlined_call_operand.<no memory space> [shape: f32[1,1], index: 6, kind: input, shape index: {}]
  %s7 = inlined_call_operand.hbm [shape: f32[1,128], index: 7, kind: output, shape index: {}]
  %s8 = sld [smem:[#allocation0]]
  $region38: #{tpu_custom_call.1} parent=0
    _
  %s10 = ssub.s32 1, %s8
  %s11 = scalar_select 0, %s10, %s8
  %v12 = vstv %s6
  %13 = vst [vmem:[#allocation2] sm:$0x1] %v12
  $region1: #{tpu_custom_call.1} parent=0
    #allocation3 [shape = 'u8[512]{0}', space=vmem, size = 0x400, scoped, tag = 'output window, operand 0, single buffered']
    #allocation4 [shape = 's32[1]{0}', space=sflag, size = 0x4, scoped, tag = 'scoped memory for tpu_custom_call.1']
    %14 = vsyncpa [#allocation4], 0
    // Predicated region
    $region2: #{tpu_custom_call.1} parent=1 // pred_check
      _
    $region3: #{tpu_custom_call.1} parent=1 // pred_check_branch
      %16 = sbr.rel (0) target = $region5
    $region4: #{tpu_custom_call.1} parent=1 // pred_region
      _
    $region5: #{tpu_custom_call.1} parent=1 // pred_fallthru
      _
    // Predicated region
    $region6: #{tpu_custom_call.1} parent=1 // pred_check
      _
    $region7: #{tpu_custom_call.1} parent=1 // pred_check_branch
      %18 = sbr.rel (0) target = $region9
    $region8: #{tpu_custom_call.1} parent=1 // pred_region
      _
    $region9: #{tpu_custom_call.1} parent=1 // pred_fallthru
      _
    // Predicated region
    $region10: #{tpu_custom_call.1} parent=1 // pred_check
      _
    $region11: #{tpu_custom_call.1} parent=1 // pred_check_branch
      %20 = sbr.rel (0) target = $region13
    $region12: #{tpu_custom_call.1} parent=1 // pred_region
      _
    $region13: #{tpu_custom_call.1} parent=1 // pred_fallthru
      _
    // Predicated region
    $region14: #{tpu_custom_call.1} parent=1 // pred_check
      _
    $region15: #{tpu_custom_call.1} parent=1 // pred_check_branch
      %22 = sbr.rel (0) target = $region17
    $region16: #{tpu_custom_call.1} parent=1 // pred_region
      _
    $region17: #{tpu_custom_call.1} parent=1 // pred_fallthru
      _
    // Predicated region
    $region18: #{tpu_custom_call.1} parent=1 // pred_check
      _
    $region19: #{tpu_custom_call.1} parent=1 // pred_check_branch
      %24 = sbr.rel (0) target = $region21
    $region20: #{tpu_custom_call.1} parent=1 // pred_region
      _
    $region21: #{tpu_custom_call.1} parent=1 // pred_fallthru
      _
    // Predicated region
    $region22: #{tpu_custom_call.1} parent=1 // pred_check
      _
    $region23: #{tpu_custom_call.1} parent=1 // pred_check_branch
      %26 = sbr.rel (0) target = $region25
    $region24: #{tpu_custom_call.1} parent=1 // pred_region
      _
    $region25: #{tpu_custom_call.1} parent=1 // pred_fallthru
      _
    // Predicated region
    $region26: #{tpu_custom_call.1} parent=1 // pred_check
      _
    $region27: #{tpu_custom_call.1} parent=1 // pred_check_branch
      %28 = sbr.rel (0) target = $region29
    $region28: #{tpu_custom_call.1} parent=1 // pred_region
      _
    $region29: #{tpu_custom_call.1} parent=1 // pred_fallthru
      _
    %v29 = vld [vmem:[%s0] sm:$0xff]
    %v30 = vld [vmem:[%s0 + $0x8] sm:$0xff]
    %v31 = vld [vmem:[%s0 + $0x10] sm:$0xff]
    %v32 = vld [vmem:[%s0 + $0x18] sm:$0xff]
    %v33 = vld [vmem:[%s1] sm:$0xff]
    %v34 = vld [vmem:[%s1 + $0x8] sm:$0xff]
    %v35 = vld [vmem:[%s1 + $0x10] sm:$0xff]
    %v36 = vld [vmem:[%s1 + $0x18] sm:$0xff]
    %v37 = vld [vmem:[%s1 + $0x20] sm:$0xff]
    %v38 = vld [vmem:[%s1 + $0x28] sm:$0xff]
    %v39 = vld [vmem:[%s1 + $0x30] sm:$0xff]
    %v40 = vld [vmem:[%s1 + $0x38] sm:$0xff]
    %v41 = vld [vmem:[%s1 + $0x40] sm:$0xff]
    %v42 = vld [vmem:[%s1 + $0x48] sm:$0xff]
    %v43 = vld [vmem:[%s1 + $0x50] sm:$0xff]
    %v44 = vld [vmem:[%s1 + $0x58] sm:$0xff]
    %v45 = vld [vmem:[%s1 + $0x60] sm:$0xff]
    %v46 = vld [vmem:[%s1 + $0x68] sm:$0xff]
    %v47 = vld [vmem:[%s1 + $0x70] sm:$0xff]
    %v48 = vld [vmem:[%s1 + $0x78] sm:$0xff]
    %v49 = vld [vmem:[%s2] sm:$0xff]
    %v50 = vld [vmem:[%s2 + $0x8] sm:$0xff]
    %v51 = vld [vmem:[%s2 + $0x10] sm:$0xff]
    %v52 = vld [vmem:[%s2 + $0x18] sm:$0xff]
    %v53 = vld [vmem:[%s2 + $0x20] sm:$0xff]
    %v54 = vld [vmem:[%s2 + $0x28] sm:$0xff]
    %v55 = vld [vmem:[%s2 + $0x30] sm:$0xff]
    %v56 = vld [vmem:[%s2 + $0x38] sm:$0xff]
    %v57 = vld [vmem:[%s2 + $0x40] sm:$0xff]
    %v58 = vld [vmem:[%s2 + $0x48] sm:$0xff]
    %v59 = vld [vmem:[%s2 + $0x50] sm:$0xff]
    %v60 = vld [vmem:[%s2 + $0x58] sm:$0xff]
    %v61 = vld [vmem:[%s2 + $0x60] sm:$0xff]
    %v62 = vld [vmem:[%s2 + $0x68] sm:$0xff]
    %v63 = vld [vmem:[%s2 + $0x70] sm:$0xff]
    %v64 = vld [vmem:[%s2 + $0x78] sm:$0xff]
    %66 = vset.pattern.permute.xlu0 0
    %67 = vperm.xlu0 %66, %v49
    %v68 = vpop.permute.xlu0 %67
    %71 = vset.pattern.permute.xlu0 0
    %72 = vperm.xlu0 %71, %v50
    %v73 = vpop.permute.xlu0 %72
    %76 = vset.pattern.permute.xlu0 0
    %77 = vperm.xlu0 %76, %v51
    %v78 = vpop.permute.xlu0 %77
    %81 = vset.pattern.permute.xlu0 0
    %82 = vperm.xlu0 %81, %v52
    %v83 = vpop.permute.xlu0 %82
    %86 = vset.pattern.permute.xlu0 0
    %87 = vperm.xlu0 %86, %v53
    %v88 = vpop.permute.xlu0 %87
    %91 = vset.pattern.permute.xlu0 0
    %92 = vperm.xlu0 %91, %v54
    %v93 = vpop.permute.xlu0 %92
    %96 = vset.pattern.permute.xlu0 0
    %97 = vperm.xlu0 %96, %v55
    %v98 = vpop.permute.xlu0 %97
    %101 = vset.pattern.permute.xlu0 0
    %102 = vperm.xlu0 %101, %v56
    %v103 = vpop.permute.xlu0 %102
    %106 = vset.pattern.permute.xlu0 0
    %107 = vperm.xlu0 %106, %v57
    %v108 = vpop.permute.xlu0 %107
    %111 = vset.pattern.permute.xlu0 0
    %112 = vperm.xlu0 %111, %v58
    %v113 = vpop.permute.xlu0 %112
    %116 = vset.pattern.permute.xlu0 0
    %117 = vperm.xlu0 %116, %v59
    %v118 = vpop.permute.xlu0 %117
    %121 = vset.pattern.permute.xlu0 0
    %122 = vperm.xlu0 %121, %v60
    %v123 = vpop.permute.xlu0 %122
    %126 = vset.pattern.permute.xlu0 0
    %127 = vperm.xlu0 %126, %v61
    %v128 = vpop.permute.xlu0 %127
    %131 = vset.pattern.permute.xlu0 0
    %132 = vperm.xlu0 %131, %v62
    %v133 = vpop.permute.xlu0 %132
    %136 = vset.pattern.permute.xlu0 0
    %137 = vperm.xlu0 %136, %v63
    %v138 = vpop.permute.xlu0 %137
    %141 = vset.pattern.permute.xlu0 0
    %142 = vperm.xlu0 %141, %v64
    %v143 = vpop.permute.xlu0 %142
    %vm145 = vcmask 261120
    %v147 = vsel %vm145, %v33, 0
    %v150 = vsel %vm145, %v34, 0
    %v153 = vsel %vm145, %v35, 0
    %v156 = vsel %vm145, %v36, 0
    %v159 = vsel %vm145, %v37, 0
    %v162 = vsel %vm145, %v38, 0
    %v165 = vsel %vm145, %v39, 0
    %v168 = vsel %vm145, %v40, 0
    %v171 = vsel %vm145, %v41, 0
    %v174 = vsel %vm145, %v42, 0
    %v177 = vsel %vm145, %v43, 0
    %v180 = vsel %vm145, %v44, 0
    %v183 = vsel %vm145, %v45, 0
    %v186 = vsel %vm145, %v46, 0
    %v189 = vsel %vm145, %v47, 0
    %v192 = vsel %vm145, %v48, 0
    %194 = vmatpush.msra.mxu0 0.0
    %195 = vmatpush.msra.mxu0 0.0
    %196 = vmatpush.msra.mxu0 0.0
    %197 = vmatpush.msra.mxu0 0.0
    %198 = vmatpush.msra.mxu0 0.0
    %199 = vmatpush.msra.mxu0 0.0
    %200 = vmatpush.msra.mxu0 0.0
    %201 = vmatpush.msra.mxu0 0.0
    %202 = vmatpush.msra.mxu0 0.0
    %203 = vmatpush.msra.mxu0 0.0
    %204 = vmatpush.msra.mxu0 0.0
    %205 = vmatpush.msra.mxu0 0.0
    %206 = vmatpush.msra.mxu0 %v32
    %207 = vmatpush.msra.mxu0 %v31
    %208 = vmatpush.msra.mxu0 %v30
    %209 = vmatpush.msra.mxu0 %v29
    %210 = vmatmul.f32.gmra.mxu0 %v147
    %v211 = vpop.f32.mrf.mxu0
    %v212 = vadd.f32 %v68, %v211
    %213 = vmatmul.f32.gmra.mxu0 %v150
    %v214 = vpop.f32.mrf.mxu0
    %v215 = vadd.f32 %v73, %v214
    %216 = vmatmul.f32.gmra.mxu0 %v153
    %v217 = vpop.f32.mrf.mxu0
    %v218 = vadd.f32 %v78, %v217
    %219 = vmatmul.f32.gmra.mxu0 %v156
    %v220 = vpop.f32.mrf.mxu0
    %v221 = vadd.f32 %v83, %v220
    %222 = vmatmul.f32.gmra.mxu0 %v159
    %v223 = vpop.f32.mrf.mxu0
    %v224 = vadd.f32 %v88, %v223
    %225 = vmatmul.f32.gmra.mxu0 %v162
    %v226 = vpop.f32.mrf.mxu0
    %v227 = vadd.f32 %v93, %v226
    %228 = vmatmul.f32.gmra.mxu0 %v165
    %v229 = vpop.f32.mrf.mxu0
    %v230 = vadd.f32 %v98, %v229
    %231 = vmatmul.f32.gmra.mxu0 %v168
    %v232 = vpop.f32.mrf.mxu0
    %v233 = vadd.f32 %v103, %v232
    %234 = vmatmul.f32.gmra.mxu0 %v171
    %v235 = vpop.f32.mrf.mxu0
    %v236 = vadd.f32 %v108, %v235
    %237 = vmatmul.f32.gmra.mxu0 %v174
    %v238 = vpop.f32.mrf.mxu0
    %v239 = vadd.f32 %v113, %v238
    %240 = vmatmul.f32.gmra.mxu0 %v177
    %v241 = vpop.f32.mrf.mxu0
    %v242 = vadd.f32 %v118, %v241
    %243 = vmatmul.f32.gmra.mxu0 %v180
    %v244 = vpop.f32.mrf.mxu0
    %v245 = vadd.f32 %v123, %v244
    %246 = vmatmul.f32.gmra.mxu0 %v183
    %v247 = vpop.f32.mrf.mxu0
    %v248 = vadd.f32 %v128, %v247
    %249 = vmatmul.f32.gmra.mxu0 %v186
    %v250 = vpop.f32.mrf.mxu0
    %v251 = vadd.f32 %v133, %v250
    %252 = vmatmul.f32.gmra.mxu0 %v189
    %v253 = vpop.f32.mrf.mxu0
    %v254 = vadd.f32 %v138, %v253
    %255 = vmatmul.f32.gmra.mxu0 %v192
    %v256 = vpop.f32.mrf.mxu0
    %v257 = vadd.f32 %v143, %v256
    %258 = vdwg.mxu0
    %vm259 = vcmp.gt.f32.partialorder %v212, 0.0
    %vm260 = vcmp.gt.f32.partialorder %v215, 0.0
    %vm261 = vcmp.gt.f32.partialorder %v218, 0.0
    %vm262 = vcmp.gt.f32.partialorder %v221, 0.0
    %vm263 = vcmp.gt.f32.partialorder %v224, 0.0
    %vm264 = vcmp.gt.f32.partialorder %v227, 0.0
    %vm265 = vcmp.gt.f32.partialorder %v230, 0.0
    %vm266 = vcmp.gt.f32.partialorder %v233, 0.0
    %vm267 = vcmp.gt.f32.partialorder %v236, 0.0
    %vm268 = vcmp.gt.f32.partialorder %v239, 0.0
    %vm269 = vcmp.gt.f32.partialorder %v242, 0.0
    %vm270 = vcmp.gt.f32.partialorder %v245, 0.0
    %vm271 = vcmp.gt.f32.partialorder %v248, 0.0
    %vm272 = vcmp.gt.f32.partialorder %v251, 0.0
    %vm273 = vcmp.gt.f32.partialorder %v254, 0.0
    %vm274 = vcmp.gt.f32.partialorder %v257, 0.0
    %v275 = vmul.f32 %v212, 0.2
    %v276 = vmul.f32 %v215, 0.2
    %v277 = vmul.f32 %v218, 0.2
    %v278 = vmul.f32 %v221, 0.2
    %v279 = vmul.f32 %v224, 0.2
    %v280 = vmul.f32 %v227, 0.2
    %v281 = vmul.f32 %v230, 0.2
    %v282 = vmul.f32 %v233, 0.2
    %v283 = vmul.f32 %v236, 0.2
    %v284 = vmul.f32 %v239, 0.2
    %v285 = vmul.f32 %v242, 0.2
    %v286 = vmul.f32 %v245, 0.2
    %v287 = vmul.f32 %v248, 0.2
    %v288 = vmul.f32 %v251, 0.2
    %v289 = vmul.f32 %v254, 0.2
    %v290 = vmul.f32 %v257, 0.2
    %v291 = vsel %vm259, %v212, %v275
    %v292 = vsel %vm260, %v215, %v276
    %v293 = vsel %vm261, %v218, %v277
    %v294 = vsel %vm262, %v221, %v278
    %v295 = vsel %vm263, %v224, %v279
    %v296 = vsel %vm264, %v227, %v280
    %v297 = vsel %vm265, %v230, %v281
    %v298 = vsel %vm266, %v233, %v282
    %v299 = vsel %vm267, %v236, %v283
    %v300 = vsel %vm268, %v239, %v284
    %v301 = vsel %vm269, %v242, %v285
    %v302 = vsel %vm270, %v245, %v286
    %v303 = vsel %vm271, %v248, %v287
    %v304 = vsel %vm272, %v251, %v288
    %v305 = vsel %vm273, %v254, %v289
    %v306 = vsel %vm274, %v257, %v290
    %v307 = vld [vmem:[%s3] sm:$0xff]
    %v308 = vld [vmem:[%s3 + $0x8] sm:$0xff]
    %v309 = vld [vmem:[%s3 + $0x10] sm:$0xff]
    %v310 = vld [vmem:[%s3 + $0x18] sm:$0xff]
    %v311 = vld [vmem:[%s3 + $0x20] sm:$0xff]
    %v312 = vld [vmem:[%s3 + $0x28] sm:$0xff]
    %v313 = vld [vmem:[%s3 + $0x30] sm:$0xff]
    %v314 = vld [vmem:[%s3 + $0x38] sm:$0xff]
    %v315 = vld [vmem:[%s3 + $0x40] sm:$0xff]
    %v316 = vld [vmem:[%s3 + $0x48] sm:$0xff]
    %v317 = vld [vmem:[%s3 + $0x50] sm:$0xff]
    %v318 = vld [vmem:[%s3 + $0x58] sm:$0xff]
    %v319 = vld [vmem:[%s3 + $0x60] sm:$0xff]
    %v320 = vld [vmem:[%s3 + $0x68] sm:$0xff]
    %v321 = vld [vmem:[%s3 + $0x70] sm:$0xff]
    %v322 = vld [vmem:[%s3 + $0x78] sm:$0xff]
    %v323 = vld [vmem:[%s4] sm:$0xff]
    %v324 = vld [vmem:[%s4 + $0x8] sm:$0xff]
    %v325 = vld [vmem:[%s4 + $0x10] sm:$0xff]
    %v326 = vld [vmem:[%s4 + $0x18] sm:$0xff]
    %v327 = vld [vmem:[%s4 + $0x20] sm:$0xff]
    %v328 = vld [vmem:[%s4 + $0x28] sm:$0xff]
    %v329 = vld [vmem:[%s4 + $0x30] sm:$0xff]
    %v330 = vld [vmem:[%s4 + $0x38] sm:$0xff]
    %v331 = vld [vmem:[%s4 + $0x40] sm:$0xff]
    %v332 = vld [vmem:[%s4 + $0x48] sm:$0xff]
    %v333 = vld [vmem:[%s4 + $0x50] sm:$0xff]
    %v334 = vld [vmem:[%s4 + $0x58] sm:$0xff]
    %v335 = vld [vmem:[%s4 + $0x60] sm:$0xff]
    %v336 = vld [vmem:[%s4 + $0x68] sm:$0xff]
    %v337 = vld [vmem:[%s4 + $0x70] sm:$0xff]
    %v338 = vld [vmem:[%s4 + $0x78] sm:$0xff]
    %340 = vset.pattern.permute.xlu0 0
    %341 = vperm.xlu0 %340, %v323
    %v342 = vpop.permute.xlu0 %341
    %345 = vset.pattern.permute.xlu0 0
    %346 = vperm.xlu0 %345, %v324
    %v347 = vpop.permute.xlu0 %346
    %350 = vset.pattern.permute.xlu0 0
    %351 = vperm.xlu0 %350, %v325
    %v352 = vpop.permute.xlu0 %351
    %355 = vset.pattern.permute.xlu0 0
    %356 = vperm.xlu0 %355, %v326
    %v357 = vpop.permute.xlu0 %356
    %360 = vset.pattern.permute.xlu0 0
    %361 = vperm.xlu0 %360, %v327
    %v362 = vpop.permute.xlu0 %361
    %365 = vset.pattern.permute.xlu0 0
    %366 = vperm.xlu0 %365, %v328
    %v367 = vpop.permute.xlu0 %366
    %370 = vset.pattern.permute.xlu0 0
    %371 = vperm.xlu0 %370, %v329
    %v372 = vpop.permute.xlu0 %371
    %375 = vset.pattern.permute.xlu0 0
    %376 = vperm.xlu0 %375, %v330
    %v377 = vpop.permute.xlu0 %376
    %380 = vset.pattern.permute.xlu0 0
    %381 = vperm.xlu0 %380, %v331
    %v382 = vpop.permute.xlu0 %381
    %385 = vset.pattern.permute.xlu0 0
    %386 = vperm.xlu0 %385, %v332
    %v387 = vpop.permute.xlu0 %386
    %390 = vset.pattern.permute.xlu0 0
    %391 = vperm.xlu0 %390, %v333
    %v392 = vpop.permute.xlu0 %391
    %395 = vset.pattern.permute.xlu0 0
    %396 = vperm.xlu0 %395, %v334
    %v397 = vpop.permute.xlu0 %396
    %400 = vset.pattern.permute.xlu0 0
    %401 = vperm.xlu0 %400, %v335
    %v402 = vpop.permute.xlu0 %401
    %405 = vset.pattern.permute.xlu0 0
    %406 = vperm.xlu0 %405, %v336
    %v407 = vpop.permute.xlu0 %406
    %410 = vset.pattern.permute.xlu0 0
    %411 = vperm.xlu0 %410, %v337
    %v412 = vpop.permute.xlu0 %411
    %415 = vset.pattern.permute.xlu0 0
    %416 = vperm.xlu0 %415, %v338
    %v417 = vpop.permute.xlu0 %416
    %419 = vmatpush.msra.mxu0 %v306
    %420 = vmatpush.msra.mxu0 %v305
    %421 = vmatpush.msra.mxu0 %v304
    %422 = vmatpush.msra.mxu0 %v303
    %423 = vmatpush.msra.mxu0 %v302
    %424 = vmatpush.msra.mxu0 %v301
    %425 = vmatpush.msra.mxu0 %v300
    %426 = vmatpush.msra.mxu0 %v299
    %427 = vmatpush.msra.mxu0 %v298
    %428 = vmatpush.msra.mxu0 %v297
    %429 = vmatpush.msra.mxu0 %v296
    %430 = vmatpush.msra.mxu0 %v295
    %431 = vmatpush.msra.mxu0 %v294
    %432 = vmatpush.msra.mxu0 %v293
    %433 = vmatpush.msra.mxu0 %v292
    %434 = vmatpush.msra.mxu0 %v291
    %435 = vmatmul.f32.gmra.mxu0 %v307
    %v436 = vpop.f32.mrf.mxu0
    %v437 = vadd.f32 %v342, %v436
    %438 = vmatmul.f32.gmra.mxu0 %v308
    %v439 = vpop.f32.mrf.mxu0
    %v440 = vadd.f32 %v347, %v439
    %441 = vmatmul.f32.gmra.mxu0 %v309
    %v442 = vpop.f32.mrf.mxu0
    %v443 = vadd.f32 %v352, %v442
    %444 = vmatmul.f32.gmra.mxu0 %v310
    %v445 = vpop.f32.mrf.mxu0
    %v446 = vadd.f32 %v357, %v445
    %447 = vmatmul.f32.gmra.mxu0 %v311
    %v448 = vpop.f32.mrf.mxu0
    %v449 = vadd.f32 %v362, %v448
    %450 = vmatmul.f32.gmra.mxu0 %v312
    %v451 = vpop.f32.mrf.mxu0
    %v452 = vadd.f32 %v367, %v451
    %453 = vmatmul.f32.gmra.mxu0 %v313
    %v454 = vpop.f32.mrf.mxu0
    %v455 = vadd.f32 %v372, %v454
    %456 = vmatmul.f32.gmra.mxu0 %v314
    %v457 = vpop.f32.mrf.mxu0
    %v458 = vadd.f32 %v377, %v457
    %459 = vmatmul.f32.gmra.mxu0 %v315
    %v460 = vpop.f32.mrf.mxu0
    %v461 = vadd.f32 %v382, %v460
    %462 = vmatmul.f32.gmra.mxu0 %v316
    %v463 = vpop.f32.mrf.mxu0
    %v464 = vadd.f32 %v387, %v463
    %465 = vmatmul.f32.gmra.mxu0 %v317
    %v466 = vpop.f32.mrf.mxu0
    %v467 = vadd.f32 %v392, %v466
    %468 = vmatmul.f32.gmra.mxu0 %v318
    %v469 = vpop.f32.mrf.mxu0
    %v470 = vadd.f32 %v397, %v469
    %471 = vmatmul.f32.gmra.mxu0 %v319
    %v472 = vpop.f32.mrf.mxu0
    %v473 = vadd.f32 %v402, %v472
    %474 = vmatmul.f32.gmra.mxu0 %v320
    %v475 = vpop.f32.mrf.mxu0
    %v476 = vadd.f32 %v407, %v475
    %477 = vmatmul.f32.gmra.mxu0 %v321
    %v478 = vpop.f32.mrf.mxu0
    %v479 = vadd.f32 %v412, %v478
    %480 = vmatmul.f32.gmra.mxu0 %v322
    %v481 = vpop.f32.mrf.mxu0
    %v482 = vadd.f32 %v417, %v481
    %483 = vdwg.mxu0
    %vm484 = vcmp.gt.f32.partialorder %v437, 0.0
    %vm485 = vcmp.gt.f32.partialorder %v440, 0.0
    %vm486 = vcmp.gt.f32.partialorder %v443, 0.0
    %vm487 = vcmp.gt.f32.partialorder %v446, 0.0
    %vm488 = vcmp.gt.f32.partialorder %v449, 0.0
    %vm489 = vcmp.gt.f32.partialorder %v452, 0.0
    %vm490 = vcmp.gt.f32.partialorder %v455, 0.0
    %vm491 = vcmp.gt.f32.partialorder %v458, 0.0
    %vm492 = vcmp.gt.f32.partialorder %v461, 0.0
    %vm493 = vcmp.gt.f32.partialorder %v464, 0.0
    %vm494 = vcmp.gt.f32.partialorder %v467, 0.0
    %vm495 = vcmp.gt.f32.partialorder %v470, 0.0
    %vm496 = vcmp.gt.f32.partialorder %v473, 0.0
    %vm497 = vcmp.gt.f32.partialorder %v476, 0.0
    %vm498 = vcmp.gt.f32.partialorder %v479, 0.0
    %vm499 = vcmp.gt.f32.partialorder %v482, 0.0
    %v500 = vmul.f32 %v437, 0.2
    %v501 = vmul.f32 %v440, 0.2
    %v502 = vmul.f32 %v443, 0.2
    %v503 = vmul.f32 %v446, 0.2
    %v504 = vmul.f32 %v449, 0.2
    %v505 = vmul.f32 %v452, 0.2
    %v506 = vmul.f32 %v455, 0.2
    %v507 = vmul.f32 %v458, 0.2
    %v508 = vmul.f32 %v461, 0.2
    %v509 = vmul.f32 %v464, 0.2
    %v510 = vmul.f32 %v467, 0.2
    %v511 = vmul.f32 %v470, 0.2
    %v512 = vmul.f32 %v473, 0.2
    %v513 = vmul.f32 %v476, 0.2
    %v514 = vmul.f32 %v479, 0.2
    %v515 = vmul.f32 %v482, 0.2
    %v516 = vsel %vm484, %v437, %v500
    %v517 = vsel %vm485, %v440, %v501
    %v518 = vsel %vm486, %v443, %v502
    %v519 = vsel %vm487, %v446, %v503
    %v520 = vsel %vm488, %v449, %v504
    %v521 = vsel %vm489, %v452, %v505
    %v522 = vsel %vm490, %v455, %v506
    %v523 = vsel %vm491, %v458, %v507
    %v524 = vsel %vm492, %v461, %v508
    %v525 = vsel %vm493, %v464, %v509
    %v526 = vsel %vm494, %v467, %v510
    %v527 = vsel %vm495, %v470, %v511
    %v528 = vsel %vm496, %v473, %v512
    %v529 = vsel %vm497, %v476, %v513
    %v530 = vsel %vm498, %v479, %v514
    %v531 = vsel %vm499, %v482, %v515
    %v532 = vld [vmem:[%s5] sm:$0xff]
    %v533 = vld [vmem:[%s5 + $0x8] sm:$0xff]
    %v534 = vld [vmem:[%s5 + $0x10] sm:$0xff]
    %v535 = vld [vmem:[%s5 + $0x18] sm:$0xff]
    %v536 = vld [vmem:[%s5 + $0x20] sm:$0xff]
    %v537 = vld [vmem:[%s5 + $0x28] sm:$0xff]
    %v538 = vld [vmem:[%s5 + $0x30] sm:$0xff]
    %v539 = vld [vmem:[%s5 + $0x38] sm:$0xff]
    %v540 = vld [vmem:[%s5 + $0x40] sm:$0xff]
    %v541 = vld [vmem:[%s5 + $0x48] sm:$0xff]
    %v542 = vld [vmem:[%s5 + $0x50] sm:$0xff]
    %v543 = vld [vmem:[%s5 + $0x58] sm:$0xff]
    %v544 = vld [vmem:[%s5 + $0x60] sm:$0xff]
    %v545 = vld [vmem:[%s5 + $0x68] sm:$0xff]
    %v546 = vld [vmem:[%s5 + $0x70] sm:$0xff]
    %v547 = vld [vmem:[%s5 + $0x78] sm:$0xff]
    %549 = vset.pattern.permute.xlu0 0
    %550 = vperm.xlu0 %549, %v532
    %v551 = vpop.permute.xlu0 %550
    %554 = vset.pattern.permute.xlu0 0
    %555 = vperm.xlu0 %554, %v533
    %v556 = vpop.permute.xlu0 %555
    %559 = vset.pattern.permute.xlu0 0
    %560 = vperm.xlu0 %559, %v534
    %v561 = vpop.permute.xlu0 %560
    %564 = vset.pattern.permute.xlu0 0
    %565 = vperm.xlu0 %564, %v535
    %v566 = vpop.permute.xlu0 %565
    %569 = vset.pattern.permute.xlu0 0
    %570 = vperm.xlu0 %569, %v536
    %v571 = vpop.permute.xlu0 %570
    %574 = vset.pattern.permute.xlu0 0
    %575 = vperm.xlu0 %574, %v537
    %v576 = vpop.permute.xlu0 %575
    %579 = vset.pattern.permute.xlu0 0
    %580 = vperm.xlu0 %579, %v538
    %v581 = vpop.permute.xlu0 %580
    %584 = vset.pattern.permute.xlu0 0
    %585 = vperm.xlu0 %584, %v539
    %v586 = vpop.permute.xlu0 %585
    %589 = vset.pattern.permute.xlu0 0
    %590 = vperm.xlu0 %589, %v540
    %v591 = vpop.permute.xlu0 %590
    %594 = vset.pattern.permute.xlu0 0
    %595 = vperm.xlu0 %594, %v541
    %v596 = vpop.permute.xlu0 %595
    %599 = vset.pattern.permute.xlu0 0
    %600 = vperm.xlu0 %599, %v542
    %v601 = vpop.permute.xlu0 %600
    %604 = vset.pattern.permute.xlu0 0
    %605 = vperm.xlu0 %604, %v543
    %v606 = vpop.permute.xlu0 %605
    %609 = vset.pattern.permute.xlu0 0
    %610 = vperm.xlu0 %609, %v544
    %v611 = vpop.permute.xlu0 %610
    %614 = vset.pattern.permute.xlu0 0
    %615 = vperm.xlu0 %614, %v545
    %v616 = vpop.permute.xlu0 %615
    %619 = vset.pattern.permute.xlu0 0
    %620 = vperm.xlu0 %619, %v546
    %v621 = vpop.permute.xlu0 %620
    %624 = vset.pattern.permute.xlu0 0
    %625 = vperm.xlu0 %624, %v547
    %v626 = vpop.permute.xlu0 %625
    %v628 = vmul.f32 %v516, %v551
    %v629 = vmul.f32 %v517, %v556
    %v630 = vmul.f32 %v518, %v561
    %v631 = vmul.f32 %v519, %v566
    %v632 = vmul.f32 %v520, %v571
    %v633 = vmul.f32 %v521, %v576
    %v634 = vmul.f32 %v522, %v581
    %v635 = vmul.f32 %v523, %v586
    %v636 = vmul.f32 %v524, %v591
    %v637 = vmul.f32 %v525, %v596
    %v638 = vmul.f32 %v526, %v601
    %v639 = vmul.f32 %v527, %v606
    %v640 = vmul.f32 %v528, %v611
    %v641 = vmul.f32 %v529, %v616
    %v642 = vmul.f32 %v530, %v621
    %v643 = vmul.f32 %v531, %v626
    %v644 = vadd.f32 %v628, %v629
    %v645 = vadd.f32 %v644, %v630
    %v646 = vadd.f32 %v645, %v631
    %v647 = vadd.f32 %v646, %v632
    %v648 = vadd.f32 %v647, %v633
    %v649 = vadd.f32 %v648, %v634
    %v650 = vadd.f32 %v649, %v635
    %v651 = vadd.f32 %v650, %v636
    %v652 = vadd.f32 %v651, %v637
    %v653 = vadd.f32 %v652, %v638
    %v654 = vadd.f32 %v653, %v639
    %v655 = vadd.f32 %v654, %v640
    %v656 = vadd.f32 %v655, %v641
    %v657 = vadd.f32 %v656, %v642
    %v658 = vadd.f32 %v657, %v643
    %v659 = vrot.slane %v658, 4
    %v660 = vadd.f32 %v658, %v659
    %v661 = vrot.slane %v660, 2
    %v662 = vadd.f32 %v660, %v661
    %v663 = vrot.slane %v662, 1
    %v664 = vadd.f32 %v662, %v663
    %v665 = vld [vmem:[#allocation2] sm:$0x1]
    %667 = vset.pattern.permute.xlu0 0
    %668 = vperm.xlu0 %667, %v665
    %v669 = vpop.permute.xlu0 %668
    %v671 = vperm.slane %v669, 0
    %v672 = vadd.f32 %v664, %v671
    %v673 = vxor.u32 %v672, 2147483648
    %v674 = vmul.f32 %v673, 1.442695
    %v675 = vpow.pop %v674
    %v676 = vadd.f32 %v675, 1.0
    %v677 = vrcp.pop %v676
    %v678 = vmul.f32 %v676, %v677
    %v679 = vsub.f32 1.0, %v678
    %v680 = vmul.f32 %v677, %v679
    %v681 = vadd.f32 %v677, %v680
    %vm682 = vweird.f32 %v676
    %vm683 = vweird.f32 %v677
    %vm684 = vmor %vm682, %vm683
    %v685 = vsel %vm684, %v677, %v681
    %v686 = vand.u32 2147483647, %v676
    %vm687 = vcmp.eq.f32.partialorder %v686, 8.507059e+37
    %v688 = vand.u32 %v676, 2147483648
    %v689 = vor.u32 1.1754944e-38, %v688
    %v690 = vsel %vm687, %v689, %v685
    %v691 = vmul.f32 1.0, %v690
    %692 = vst [vmem:[#allocation3] sm:$0x1] %v691
    // Predicated region
    $region30: #{tpu_custom_call.1} parent=1 // pred_check
      _
    $region31: #{tpu_custom_call.1} parent=1 // pred_check_branch
      %694 = sbr.rel (0) target = $region33
    $region32: #{tpu_custom_call.1} parent=1 // pred_region
      %696 = vsyncadd [#allocation4], 0
      %s698 = sshll.u32 [#allocation3], 4
      %s699 = int_to_ptr.vmem [resolvable:$true] %s698
      %s700 = sshll.u32 %s7, 4
      %s701 = int_to_ptr.hbm [resolvable:$true] %s700
      %703 = dma.vmem_to_hbm [thread:$0]  %s699, 16, %s701, [#allocation4]
    $region33: #{tpu_custom_call.1} parent=1 // pred_fallthru
      _
    // Predicated region
    $region34: #{tpu_custom_call.1} parent=1 // pred_check
      _
    $region35: #{tpu_custom_call.1} parent=1 // pred_check_branch
      %705 = sbr.rel (0) target = $region37
    $region36: #{tpu_custom_call.1} parent=1 // pred_region
      %707 = dma.done [#allocation4], 16
    $region37: #{tpu_custom_call.1} parent=1 // pred_fallthru
      _
    %708 = vsyncpa [#allocation4], 1

</llo_original>
